<compile_context>
chip_gen: v7x
topology: tpu7x:2x2x1
jax: 0.10.0
libtpu: 0.0.40
codegen_flags: <defaults>
</compile_context>

<pallas_src>
import jax
import jax.numpy as jnp
from jax.experimental import pallas as pl
from jax.experimental.pallas import tpu as pltpu


def _make_curve_kernel(num_bends, compute_dtype):
    def kernel(coeffs_ref,      # SMEM (NB,)             f32   (scalar-prefetched)
               u_ref,           # VMEM (TB, Du)
               x_ref,           # VMEM (TB, Dx)
               w1_ref,          # VMEM (NB, Du, H)        (in, out) orientation
               b1_ref,          # VMEM (NB, 1, H)
               wc_ref,          # VMEM (NB, H+Dx, Dout)   [W2 ; Ws] stacked on K
               b2_ref,          # VMEM (NB, 1, Dout)
               out_ref):        # VMEM (TB, Dout)
        # Hoist coefficient scalars: each SMEM entry is read exactly once and the
        # same Python values are reused by every blend below.
        c = [coeffs_ref[k] for k in range(num_bends)]

        def blend(ref):
            acc = c[0] * ref[0]
            for k in range(1, num_bends):
                acc = acc + c[k] * ref[k]
            return acc

        # Curve-blended parameters (f32 VPU work; small, overlapped with DMA).
        w1 = blend(w1_ref)          # (Du, H)
        b1 = blend(b1_ref)          # (1, H)
        wc = blend(wc_ref)          # (H+Dx, Dout)
        b2 = blend(b2_ref)          # (1, Dout)

        u = u_ref[...]
        x = x_ref[...]

        # Layer 1: u @ W1 + b1, tanh.  Weights already (in, out) -> no transpose.
        h = jnp.tanh(
            jnp.dot(u.astype(compute_dtype), w1.astype(compute_dtype),
                    preferred_element_type=jnp.float32) + b1)

        # Fused layer 2 + structural term: [h | x] @ [W2 ; Ws] + b2  (single MXU op).
        hx = jnp.concatenate([h, x], axis=-1)          # (TB, H+Dx)
        y = jnp.dot(hx.astype(compute_dtype), wc.astype(compute_dtype),
                    preferred_element_type=jnp.float32) + b2

        out_ref[...] = y.astype(out_ref.dtype)

    return kernel


def curve_forward(u, x, coeffs, w1, b1, w2, b2, ws, *,
                  compute_dtype=jnp.float32, block_b=512):
    """Pallas forward for the curve architecture.

    Parameters keep the PyTorch stacked-Linear layout:
      w1: (NB, H, Du), b1: (NB, 1, H), w2: (NB, Dout, H), b2: (NB, 1, Dout),
      ws: (NB, Dout, Dx) (structural linear, no bias), coeffs: (NB,).
    """
    B, Du = u.shape
    Dx = x.shape[1]
    NB, H, _ = w1.shape
    Dout = w2.shape[1]

    # Layout plumbing OUTSIDE the kernel:
    #  (NB, out, in) -> (NB, in, out) so the blended weights are consumed by the MXU
    #  directly (no in-kernel .T), and stack [W2 ; Ws] along the contraction dim so
    #  layer-2 and the structural matmul become one dot.
    w1_t = jnp.swapaxes(w1, 1, 2)                        # (NB, Du, H)
    wcat = jnp.concatenate([jnp.swapaxes(w2, 1, 2),      # (NB, H, Dout)
                            jnp.swapaxes(ws, 1, 2)],     # (NB, Dx, Dout)
                           axis=1)                       # (NB, H+Dx, Dout)

    TB = min(B, block_b)
    grid = (pl.cdiv(B, TB),)

    kernel = _make_curve_kernel(NB, compute_dtype)

    grid_spec = pltpu.PrefetchScalarGridSpec(
        num_scalar_prefetch=1,                 # coeffs -> SMEM before the grid runs
        grid=grid,
        in_specs=[
            # Batch-tiled activations (pipelined / double-buffered).
            pl.BlockSpec((TB, Du), lambda i, c: (i, 0)),
            pl.BlockSpec((TB, Dx), lambda i, c: (i, 0)),
            # Weights / biases: constant block index -> DMA'd once, stay resident.
            pl.BlockSpec((NB, Du, H), lambda i, c: (0, 0, 0)),
            pl.BlockSpec((NB, 1, H), lambda i, c: (0, 0, 0)),
            pl.BlockSpec((NB, H + Dx, Dout), lambda i, c: (0, 0, 0)),
            pl.BlockSpec((NB, 1, Dout), lambda i, c: (0, 0, 0)),
        ],
        out_specs=pl.BlockSpec((TB, Dout), lambda i, c: (i, 0)),
    )

    return pl.pallas_call(
        kernel,
        out_shape=jax.ShapeDtypeStruct((B, Dout), jnp.float32),
        grid_spec=grid_spec,
        compiler_params=pltpu.CompilerParams(
            dimension_semantics=("parallel",)),      # batch axis: shard across TCs (v7x)
    )(coeffs, u, x, w1_t, b1, wcat, b2)


def curve_forward_ref(u, x, coeffs, w1, b1, w2, b2, ws):
    """Pure-JAX reference with identical semantics (PyTorch F.linear convention)."""
    w1t = jnp.einsum('k,koi->oi', coeffs, w1)
    b1t = jnp.einsum('k,kro->ro', coeffs, b1)
    w2t = jnp.einsum('k,koi->oi', coeffs, w2)
    b2t = jnp.einsum('k,kro->ro', coeffs, b2)
    wst = jnp.einsum('k,koi->oi', coeffs, ws)
    h = jnp.tanh(u @ w1t.T + b1t)
    y = h @ w2t.T + b2t
    return y + x @ wst.T


if __name__ == "__main__":
    # Small shapes consistent with the module's forward:
    #   u: (batch, Du), x: (batch, Dx), coeffs_t: (num_bends,)
    B, Du, H, Dout, Dx, NB = 8, 32, 32, 16, 24, 3

    key = jax.random.PRNGKey(0)
    k_u, k_x, k_w1, k_b1, k_w2, k_b2, k_ws = jax.random.split(key, 7)

    u = jax.random.normal(k_u, (B, Du), dtype=jnp.float32)
    x = jax.random.normal(k_x, (B, Dx), dtype=jnp.float32)

    # Deterministic synthetic per-bend parameters (num_bends copies each).
    w1 = jax.random.normal(k_w1, (NB, H, Du), dtype=jnp.float32) * 0.1
    b1 = jax.random.normal(k_b1, (NB, 1, H), dtype=jnp.float32) * 0.1
    w2 = jax.random.normal(k_w2, (NB, Dout, H), dtype=jnp.float32) * 0.1
    b2 = jax.random.normal(k_b2, (NB, 1, Dout), dtype=jnp.float32) * 0.1
    ws = jax.random.normal(k_ws, (NB, Dout, Dx), dtype=jnp.float32) * 0.1

    # Bezier coefficients at t = 0.3 for 3 bends: [(1-t)^2, 2t(1-t), t^2]
    t = 0.3
    coeffs = jnp.array([(1.0 - t) ** 2, 2.0 * t * (1.0 - t), t ** 2],
                       dtype=jnp.float32)

    ref = curve_forward_ref(u, x, coeffs, w1, b1, w2, b2, ws)

    # f32 path (default): exact-ish match vs reference.
    out = curve_forward(u, x, coeffs, w1, b1, w2, b2, ws)
    out = jax.block_until_ready(out)
    assert out.shape == (B, Dout)
    assert jnp.allclose(out, ref, atol=1e-5, rtol=1e-5), "f32 mismatch vs reference"

    # bf16-MXU path (v6e/v7x fast path; blend/bias/tanh stay f32): loose tolerance.
    out_bf16 = curve_forward(u, x, coeffs, w1, b1, w2, b2, ws,
                             compute_dtype=jnp.bfloat16)
    out_bf16 = jax.block_until_ready(out_bf16)
    assert jnp.allclose(out_bf16, ref, atol=5e-2, rtol=5e-2), "bf16 mismatch vs reference"

    print("KERNEL_OK")
</pallas_src>

<mosaic_0001>
module attributes {stable_mosaic.version = 11 : i64} {
  func.func @kernel(%arg0: i32, %arg1: memref<3xf32, #tpu.memory_space<smem>>, %arg2: memref<8x32xf32, #tpu.memory_space<vmem>>, %arg3: memref<8x24xf32, #tpu.memory_space<vmem>>, %arg4: memref<3x32x32xf32, #tpu.memory_space<vmem>>, %arg5: memref<3x1x32xf32, #tpu.memory_space<vmem>>, %arg6: memref<3x56x16xf32, #tpu.memory_space<vmem>>, %arg7: memref<3x1x16xf32, #tpu.memory_space<vmem>>, %arg8: memref<8x16xf32, #tpu.memory_space<vmem>>) attributes {dimension_semantics = [#tpu.dimension_semantics<parallel>], iteration_bounds = array<i64: 1>, scalar_prefetch = 1 : i64, scratch_operands = 0 : i64, tpu.core_type = #tpu.core_type<tc>, window_params = [{transform_indices = @transform_0, window_bounds = array<i64: 8, 32>}, {transform_indices = @transform_1, window_bounds = array<i64: 8, 24>}, {pipeline_mode = #tpu.pipeline_mode<synchronous>, transform_indices = @transform_2, window_bounds = array<i64: 3, 32, 32>}, {pipeline_mode = #tpu.pipeline_mode<synchronous>, transform_indices = @transform_3, window_bounds = array<i64: 3, 1, 32>}, {pipeline_mode = #tpu.pipeline_mode<synchronous>, transform_indices = @transform_4, window_bounds = array<i64: 3, 56, 16>}, {pipeline_mode = #tpu.pipeline_mode<synchronous>, transform_indices = @transform_5, window_bounds = array<i64: 3, 1, 16>}, {transform_indices = @transform_6, window_bounds = array<i64: 8, 16>}]} {
    %c0 = arith.constant 0 : index
    %0 = memref.load %arg1[%c0] : memref<3xf32, #tpu.memory_space<smem>>
    %c1 = arith.constant 1 : index
    %1 = memref.load %arg1[%c1] : memref<3xf32, #tpu.memory_space<smem>>
    %c2 = arith.constant 2 : index
    %2 = memref.load %arg1[%c2] : memref<3xf32, #tpu.memory_space<smem>>
    %c0_0 = arith.constant 0 : index
    %c0_1 = arith.constant 0 : index
    %c0_2 = arith.constant 0 : index
    %3 = vector.load %arg4[%c0_0, %c0_1, %c0_2] : memref<3x32x32xf32, #tpu.memory_space<vmem>>, vector<1x32x32xf32>
    %4 = vector.shape_cast %3 : vector<1x32x32xf32> to vector<32x32xf32>
    %5 = vector.broadcast %0 : f32 to vector<32x32xf32>
    %6 = arith.mulf %5, %4 : vector<32x32xf32>
    %c1_3 = arith.constant 1 : index
    %c0_4 = arith.constant 0 : index
    %c0_5 = arith.constant 0 : index
    %7 = vector.load %arg4[%c1_3, %c0_4, %c0_5] : memref<3x32x32xf32, #tpu.memory_space<vmem>>, vector<1x32x32xf32>
    %8 = vector.shape_cast %7 : vector<1x32x32xf32> to vector<32x32xf32>
    %9 = vector.broadcast %1 : f32 to vector<32x32xf32>
    %10 = arith.mulf %9, %8 : vector<32x32xf32>
    %11 = arith.addf %6, %10 : vector<32x32xf32>
    %c2_6 = arith.constant 2 : index
    %c0_7 = arith.constant 0 : index
    %c0_8 = arith.constant 0 : index
    %12 = vector.load %arg4[%c2_6, %c0_7, %c0_8] : memref<3x32x32xf32, #tpu.memory_space<vmem>>, vector<1x32x32xf32>
    %13 = vector.shape_cast %12 : vector<1x32x32xf32> to vector<32x32xf32>
    %14 = vector.broadcast %2 : f32 to vector<32x32xf32>
    %15 = arith.mulf %14, %13 : vector<32x32xf32>
    %16 = arith.addf %11, %15 : vector<32x32xf32>
    %c0_9 = arith.constant 0 : index
    %c0_10 = arith.constant 0 : index
    %c0_11 = arith.constant 0 : index
    %17 = vector.load %arg5[%c0_9, %c0_10, %c0_11] : memref<3x1x32xf32, #tpu.memory_space<vmem>>, vector<1x1x32xf32>
    %18 = vector.shape_cast %17 : vector<1x1x32xf32> to vector<1x32xf32>
    %19 = vector.broadcast %0 : f32 to vector<1x32xf32>
    %20 = arith.mulf %19, %18 : vector<1x32xf32>
    %c1_12 = arith.constant 1 : index
    %c0_13 = arith.constant 0 : index
    %c0_14 = arith.constant 0 : index
    %21 = vector.load %arg5[%c1_12, %c0_13, %c0_14] : memref<3x1x32xf32, #tpu.memory_space<vmem>>, vector<1x1x32xf32>
    %22 = vector.shape_cast %21 : vector<1x1x32xf32> to vector<1x32xf32>
    %23 = vector.broadcast %1 : f32 to vector<1x32xf32>
    %24 = arith.mulf %23, %22 : vector<1x32xf32>
    %25 = arith.addf %20, %24 : vector<1x32xf32>
    %c2_15 = arith.constant 2 : index
    %c0_16 = arith.constant 0 : index
    %c0_17 = arith.constant 0 : index
    %26 = vector.load %arg5[%c2_15, %c0_16, %c0_17] : memref<3x1x32xf32, #tpu.memory_space<vmem>>, vector<1x1x32xf32>
    %27 = vector.shape_cast %26 : vector<1x1x32xf32> to vector<1x32xf32>
    %28 = vector.broadcast %2 : f32 to vector<1x32xf32>
    %29 = arith.mulf %28, %27 : vector<1x32xf32>
    %30 = arith.addf %25, %29 : vector<1x32xf32>
    %c0_18 = arith.constant 0 : index
    %c0_19 = arith.constant 0 : index
    %c0_20 = arith.constant 0 : index
    %31 = vector.load %arg6[%c0_18, %c0_19, %c0_20] : memref<3x56x16xf32, #tpu.memory_space<vmem>>, vector<1x56x16xf32>
    %32 = vector.shape_cast %31 : vector<1x56x16xf32> to vector<56x16xf32>
    %33 = vector.broadcast %0 : f32 to vector<56x16xf32>
    %34 = arith.mulf %33, %32 : vector<56x16xf32>
    %c1_21 = arith.constant 1 : index
    %c0_22 = arith.constant 0 : index
    %c0_23 = arith.constant 0 : index
    %35 = vector.load %arg6[%c1_21, %c0_22, %c0_23] : memref<3x56x16xf32, #tpu.memory_space<vmem>>, vector<1x56x16xf32>
    %36 = vector.shape_cast %35 : vector<1x56x16xf32> to vector<56x16xf32>
    %37 = vector.broadcast %1 : f32 to vector<56x16xf32>
    %38 = arith.mulf %37, %36 : vector<56x16xf32>
    %39 = arith.addf %34, %38 : vector<56x16xf32>
    %c2_24 = arith.constant 2 : index
    %c0_25 = arith.constant 0 : index
    %c0_26 = arith.constant 0 : index
    %40 = vector.load %arg6[%c2_24, %c0_25, %c0_26] : memref<3x56x16xf32, #tpu.memory_space<vmem>>, vector<1x56x16xf32>
    %41 = vector.shape_cast %40 : vector<1x56x16xf32> to vector<56x16xf32>
    %42 = vector.broadcast %2 : f32 to vector<56x16xf32>
    %43 = arith.mulf %42, %41 : vector<56x16xf32>
    %44 = arith.addf %39, %43 : vector<56x16xf32>
    %c0_27 = arith.constant 0 : index
    %c0_28 = arith.constant 0 : index
    %c0_29 = arith.constant 0 : index
    %45 = vector.load %arg7[%c0_27, %c0_28, %c0_29] : memref<3x1x16xf32, #tpu.memory_space<vmem>>, vector<1x1x16xf32>
    %46 = vector.shape_cast %45 : vector<1x1x16xf32> to vector<1x16xf32>
    %47 = vector.broadcast %0 : f32 to vector<1x16xf32>
    %48 = arith.mulf %47, %46 : vector<1x16xf32>
    %c1_30 = arith.constant 1 : index
    %c0_31 = arith.constant 0 : index
    %c0_32 = arith.constant 0 : index
    %49 = vector.load %arg7[%c1_30, %c0_31, %c0_32] : memref<3x1x16xf32, #tpu.memory_space<vmem>>, vector<1x1x16xf32>
    %50 = vector.shape_cast %49 : vector<1x1x16xf32> to vector<1x16xf32>
    %51 = vector.broadcast %1 : f32 to vector<1x16xf32>
    %52 = arith.mulf %51, %50 : vector<1x16xf32>
    %53 = arith.addf %48, %52 : vector<1x16xf32>
    %c2_33 = arith.constant 2 : index
    %c0_34 = arith.constant 0 : index
    %c0_35 = arith.constant 0 : index
    %54 = vector.load %arg7[%c2_33, %c0_34, %c0_35] : memref<3x1x16xf32, #tpu.memory_space<vmem>>, vector<1x1x16xf32>
    %55 = vector.shape_cast %54 : vector<1x1x16xf32> to vector<1x16xf32>
    %56 = vector.broadcast %2 : f32 to vector<1x16xf32>
    %57 = arith.mulf %56, %55 : vector<1x16xf32>
    %58 = arith.addf %53, %57 : vector<1x16xf32>
    %c0_36 = arith.constant 0 : index
    %c0_37 = arith.constant 0 : index
    %59 = vector.load %arg2[%c0_36, %c0_37] : memref<8x32xf32, #tpu.memory_space<vmem>>, vector<8x32xf32>
    %c0_38 = arith.constant 0 : index
    %c0_39 = arith.constant 0 : index
    %60 = vector.load %arg3[%c0_38, %c0_39] : memref<8x24xf32, #tpu.memory_space<vmem>>, vector<8x24xf32>
    %cst = arith.constant dense<0.000000e+00> : vector<8x32xf32>
    %61 = tpu.matmul %59, %16, %cst {dimension_numbers = #tpu.dot_dimension_numbers<[1], [0], [0], [1], [0, 0, 1, 1], [], []>} : vector<8x32xf32>, vector<32x32xf32>, vector<8x32xf32> -> vector<8x32xf32>
    %62 = vector.broadcast %30 : vector<1x32xf32> to vector<8x32xf32>
    %63 = arith.addf %61, %62 : vector<8x32xf32>
    %64 = math.tanh %63 : vector<8x32xf32>
    %65 = tpu.concatenate %64, %60 in 1 : vector<8x32xf32>, vector<8x24xf32> -> vector<8x56xf32>
    %cst_40 = arith.constant dense<0.000000e+00> : vector<8x16xf32>
    %66 = tpu.matmul %65, %44, %cst_40 {dimension_numbers = #tpu.dot_dimension_numbers<[1], [0], [0], [1], [0, 0, 1, 1], [], []>} : vector<8x56xf32>, vector<56x16xf32>, vector<8x16xf32> -> vector<8x16xf32>
    %67 = vector.broadcast %58 : vector<1x16xf32> to vector<8x16xf32>
    %68 = arith.addf %66, %67 : vector<8x16xf32>
    %c0_41 = arith.constant 0 : index
    %c0_42 = arith.constant 0 : index
    %69 = vector.load %arg8[%c0_41, %c0_42] : memref<8x16xf32, #tpu.memory_space<vmem>>, vector<8x16xf32>
    tpu.vector_store %arg8[%c0_41, %c0_42], %68 {strides = array<i32>} : memref<8x16xf32, #tpu.memory_space<vmem>>, vector<8x16xf32>,
    return
  }
  func.func @transform_0(%arg0: i32, %arg1: memref<3xf32, #tpu.memory_space<smem>>) -> (i32, i32) {
    %c0_i32 = arith.constant 0 : i32
    %c0_i32_0 = arith.constant 0 : i32
    return %arg0, %c0_i32 : i32, i32
  }
  func.func @transform_1(%arg0: i32, %arg1: memref<3xf32, #tpu.memory_space<smem>>) -> (i32, i32) {
    %c0_i32 = arith.constant 0 : i32
    %c0_i32_0 = arith.constant 0 : i32
    return %arg0, %c0_i32 : i32, i32
  }
  func.func @transform_2(%arg0: i32, %arg1: memref<3xf32, #tpu.memory_space<smem>>) -> (i32, i32, i32) {
    %c0_i32 = arith.constant 0 : i32
    %c0_i32_0 = arith.constant 0 : i32
    %c0_i32_1 = arith.constant 0 : i32
    %c0_i32_2 = arith.constant 0 : i32
    return %c0_i32, %c0_i32_0, %c0_i32_1 : i32, i32, i32
  }
  func.func @transform_3(%arg0: i32, %arg1: memref<3xf32, #tpu.memory_space<smem>>) -> (i32, i32, i32) {
    %c0_i32 = arith.constant 0 : i32
    %c0_i32_0 = arith.constant 0 : i32
    %c0_i32_1 = arith.constant 0 : i32
    %c0_i32_2 = arith.constant 0 : i32
    return %c0_i32, %c0_i32_0, %c0_i32_1 : i32, i32, i32
  }
  func.func @transform_4(%arg0: i32, %arg1: memref<3xf32, #tpu.memory_space<smem>>) -> (i32, i32, i32) {
    %c0_i32 = arith.constant 0 : i32
    %c0_i32_0 = arith.constant 0 : i32
    %c0_i32_1 = arith.constant 0 : i32
    %c0_i32_2 = arith.constant 0 : i32
    return %c0_i32, %c0_i32_0, %c0_i32_1 : i32, i32, i32
  }
  func.func @transform_5(%arg0: i32, %arg1: memref<3xf32, #tpu.memory_space<smem>>) -> (i32, i32, i32) {
    %c0_i32 = arith.constant 0 : i32
    %c0_i32_0 = arith.constant 0 : i32
    %c0_i32_1 = arith.constant 0 : i32
    %c0_i32_2 = arith.constant 0 : i32
    return %c0_i32, %c0_i32_0, %c0_i32_1 : i32, i32, i32
  }
  func.func @transform_6(%arg0: i32, %arg1: memref<3xf32, #tpu.memory_space<smem>>) -> (i32, i32) {
    %c0_i32 = arith.constant 0 : i32
    %c0_i32_0 = arith.constant 0 : i32
    return %arg0, %c0_i32 : i32, i32
  }
}

</mosaic_0001>

<llo_original>
// kernel: tpu_custom_call.1
$region0: #{tpu_custom_call.1}
  #allocation0 [shape = 'u32[]', space=smem, size = 0x4, offset = 0x4, fixed_abs, tag = 'smem constant byte address 0x4 - core index']
  #allocation1 [shape = 'u32[144,128]{1,0:T(1,128)}', space=vmem, size = 0x12000, scoped, tag = 'internal scratch']
  #allocation2 [shape = 's32[1]{0}', space=sflag, size = 0x4, scoped, tag = 'scoped memory for tpu_custom_call.1']
  #allocation3 [shape = 'u8[512]{0}', space=smem, size = 0x200, scoped, tag = 'prefetched SMEM operand 0']
  %s0 = inlined_call_operand.vmem [shape: f32[3], index: 0, kind: input, shape index: {}]
  %s1 = inlined_call_operand.vmem [shape: f32[8,32], index: 1, kind: input, shape index: {}]
  %s2 = inlined_call_operand.vmem [shape: f32[8,24], index: 2, kind: input, shape index: {}]
  %s3 = inlined_call_operand.vmem [shape: f32[3,32,32], index: 3, kind: input, shape index: {}]
  %s4 = inlined_call_operand.vmem [shape: f32[3,1,32], index: 4, kind: input, shape index: {}]
  %s5 = inlined_call_operand.vmem [shape: f32[3,56,16], index: 5, kind: input, shape index: {}]
  %s6 = inlined_call_operand.vmem [shape: f32[3,1,16], index: 6, kind: input, shape index: {}]
  %s7 = inlined_call_operand.hbm [shape: f32[8,16], index: 7, kind: output, shape index: {}]
  %s8 = sld [smem:[#allocation0]]
  $region34: #{tpu_custom_call.1} parent=0
    _
  %s10 = ssub.s32 1, %s8
  %s11 = scalar_select 0, %s10, %s8
  %s12 = sshll.u32 %s0, 4
  %s13 = int_to_ptr.vmem [resolvable:$true] %s12
  %15 = dma.vmem_to_smem %s13, 16, [#allocation3], [#allocation2]
  %16 = dma.done [#allocation2], 16
  %17 = sfence
  $region1: #{tpu_custom_call.1} parent=0
    #allocation4 [shape = 'u8[4096]{0}', space=vmem, size = 0x1000, scoped, tag = 'output window, operand 0, single buffered']
    #allocation5 [shape = 's32[1]{0}', space=sflag, size = 0x4, scoped, tag = 'scoped memory for tpu_custom_call.1']
    %18 = vsyncpa [#allocation5], 0
    // Predicated region
    $region2: #{tpu_custom_call.1} parent=1 // pred_check
      _
    $region3: #{tpu_custom_call.1} parent=1 // pred_check_branch
      %20 = sbr.rel (0) target = $region5
    $region4: #{tpu_custom_call.1} parent=1 // pred_region
      _
    $region5: #{tpu_custom_call.1} parent=1 // pred_fallthru
      _
    // Predicated region
    $region6: #{tpu_custom_call.1} parent=1 // pred_check
      _
    $region7: #{tpu_custom_call.1} parent=1 // pred_check_branch
      %22 = sbr.rel (0) target = $region9
    $region8: #{tpu_custom_call.1} parent=1 // pred_region
      _
    $region9: #{tpu_custom_call.1} parent=1 // pred_fallthru
      _
    // Predicated region
    $region10: #{tpu_custom_call.1} parent=1 // pred_check
      _
    $region11: #{tpu_custom_call.1} parent=1 // pred_check_branch
      %24 = sbr.rel (0) target = $region13
    $region12: #{tpu_custom_call.1} parent=1 // pred_region
      _
    $region13: #{tpu_custom_call.1} parent=1 // pred_fallthru
      _
    // Predicated region
    $region14: #{tpu_custom_call.1} parent=1 // pred_check
      _
    $region15: #{tpu_custom_call.1} parent=1 // pred_check_branch
      %26 = sbr.rel (0) target = $region17
    $region16: #{tpu_custom_call.1} parent=1 // pred_region
      _
    $region17: #{tpu_custom_call.1} parent=1 // pred_fallthru
      _
    // Predicated region
    $region18: #{tpu_custom_call.1} parent=1 // pred_check
      _
    $region19: #{tpu_custom_call.1} parent=1 // pred_check_branch
      %28 = sbr.rel (0) target = $region21
    $region20: #{tpu_custom_call.1} parent=1 // pred_region
      _
    $region21: #{tpu_custom_call.1} parent=1 // pred_fallthru
      _
    // Predicated region
    $region22: #{tpu_custom_call.1} parent=1 // pred_check
      _
    $region23: #{tpu_custom_call.1} parent=1 // pred_check_branch
      %30 = sbr.rel (0) target = $region25
    $region24: #{tpu_custom_call.1} parent=1 // pred_region
      _
    $region25: #{tpu_custom_call.1} parent=1 // pred_fallthru
      _
    %s31 = sld [smem:[#allocation3]]
    %s32 = sld [smem:[#allocation3 + $0x1]]
    %s33 = sld [smem:[#allocation3 + $0x2]]
    %v34 = vld [vmem:[%s3] sm:$0xff]
    %v35 = vld [vmem:[%s3 + $0x8] sm:$0xff]
    %v36 = vld [vmem:[%s3 + $0x10] sm:$0xff]
    %v37 = vld [vmem:[%s3 + $0x18] sm:$0xff]
    %v38 = vstv %s31
    %v39 = vmul.f32 %v38, %v34
    %v40 = vmul.f32 %v38, %v35
    %v41 = vmul.f32 %v38, %v36
    %v42 = vmul.f32 %v38, %v37
    %s43 = scalar_lea.vmem %s3, 32
    %v44 = vld [vmem:[%s43] sm:$0xff]
    %v45 = vld [vmem:[%s43 + $0x8] sm:$0xff]
    %v46 = vld [vmem:[%s43 + $0x10] sm:$0xff]
    %v47 = vld [vmem:[%s43 + $0x18] sm:$0xff]
    %v48 = vstv %s32
    %v49 = vmul.f32 %v48, %v44
    %v50 = vmul.f32 %v48, %v45
    %v51 = vmul.f32 %v48, %v46
    %v52 = vmul.f32 %v48, %v47
    %v53 = vadd.f32 %v39, %v49
    %v54 = vadd.f32 %v40, %v50
    %v55 = vadd.f32 %v41, %v51
    %v56 = vadd.f32 %v42, %v52
    %s57 = scalar_lea.vmem %s3, 64
    %v58 = vld [vmem:[%s57] sm:$0xff]
    %v59 = vld [vmem:[%s57 + $0x8] sm:$0xff]
    %v60 = vld [vmem:[%s57 + $0x10] sm:$0xff]
    %v61 = vld [vmem:[%s57 + $0x18] sm:$0xff]
    %v62 = vstv %s33
    %v63 = vmul.f32 %v62, %v58
    %v64 = vmul.f32 %v62, %v59
    %v65 = vmul.f32 %v62, %v60
    %v66 = vmul.f32 %v62, %v61
    %v67 = vadd.f32 %v53, %v63
    %v68 = vadd.f32 %v54, %v64
    %v69 = vadd.f32 %v55, %v65
    %v70 = vadd.f32 %v56, %v66
    %v71 = vld [vmem:[%s4] sm:$0x1]
    %v72 = vmul.f32 %v38, %v71
    %s73 = scalar_lea.vmem %s4, 1
    %v74 = vld [vmem:[%s73] sm:$0x1]
    %v75 = vmul.f32 %v48, %v74
    %v76 = vadd.f32 %v72, %v75
    %s77 = scalar_lea.vmem %s4, 2
    %v78 = vld [vmem:[%s77] sm:$0x1]
    %v79 = vmul.f32 %v62, %v78
    %v80 = vadd.f32 %v76, %v79
    %v81 = vld [vmem:[%s5] sm:$0xff]
    %v82 = vld [vmem:[%s5 + $0x8] sm:$0xff]
    %v83 = vld [vmem:[%s5 + $0x10] sm:$0xff]
    %v84 = vld [vmem:[%s5 + $0x18] sm:$0xff]
    %v85 = vld [vmem:[%s5 + $0x20] sm:$0xff]
    %v86 = vld [vmem:[%s5 + $0x28] sm:$0xff]
    %v87 = vld [vmem:[%s5 + $0x30] sm:$0xff]
    %v88 = vmul.f32 %v38, %v81
    %v89 = vmul.f32 %v38, %v82
    %v90 = vmul.f32 %v38, %v83
    %v91 = vmul.f32 %v38, %v84
    %v92 = vmul.f32 %v38, %v85
    %v93 = vmul.f32 %v38, %v86
    %v94 = vmul.f32 %v38, %v87
    %s95 = scalar_lea.vmem %s5, 56
    %v96 = vld [vmem:[%s95] sm:$0xff]
    %v97 = vld [vmem:[%s95 + $0x8] sm:$0xff]
    %v98 = vld [vmem:[%s95 + $0x10] sm:$0xff]
    %v99 = vld [vmem:[%s95 + $0x18] sm:$0xff]
    %v100 = vld [vmem:[%s95 + $0x20] sm:$0xff]
    %v101 = vld [vmem:[%s95 + $0x28] sm:$0xff]
    %v102 = vld [vmem:[%s95 + $0x30] sm:$0xff]
    %v103 = vmul.f32 %v48, %v96
    %v104 = vmul.f32 %v48, %v97
    %v105 = vmul.f32 %v48, %v98
    %v106 = vmul.f32 %v48, %v99
    %v107 = vmul.f32 %v48, %v100
    %v108 = vmul.f32 %v48, %v101
    %v109 = vmul.f32 %v48, %v102
    %v110 = vadd.f32 %v88, %v103
    %v111 = vadd.f32 %v89, %v104
    %v112 = vadd.f32 %v90, %v105
    %v113 = vadd.f32 %v91, %v106
    %v114 = vadd.f32 %v92, %v107
    %v115 = vadd.f32 %v93, %v108
    %v116 = vadd.f32 %v94, %v109
    %s117 = scalar_lea.vmem %s5, 112
    %v118 = vld [vmem:[%s117] sm:$0xff]
    %v119 = vld [vmem:[%s117 + $0x8] sm:$0xff]
    %v120 = vld [vmem:[%s117 + $0x10] sm:$0xff]
    %v121 = vld [vmem:[%s117 + $0x18] sm:$0xff]
    %v122 = vld [vmem:[%s117 + $0x20] sm:$0xff]
    %v123 = vld [vmem:[%s117 + $0x28] sm:$0xff]
    %v124 = vld [vmem:[%s117 + $0x30] sm:$0xff]
    %v125 = vmul.f32 %v62, %v118
    %v126 = vmul.f32 %v62, %v119
    %v127 = vmul.f32 %v62, %v120
    %v128 = vmul.f32 %v62, %v121
    %v129 = vmul.f32 %v62, %v122
    %v130 = vmul.f32 %v62, %v123
    %v131 = vmul.f32 %v62, %v124
    %v132 = vadd.f32 %v110, %v125
    %v133 = vadd.f32 %v111, %v126
    %v134 = vadd.f32 %v112, %v127
    %v135 = vadd.f32 %v113, %v128
    %v136 = vadd.f32 %v114, %v129
    %v137 = vadd.f32 %v115, %v130
    %v138 = vadd.f32 %v116, %v131
    %v139 = vld [vmem:[%s6] sm:$0x1]
    %v140 = vmul.f32 %v38, %v139
    %s141 = scalar_lea.vmem %s6, 1
    %v142 = vld [vmem:[%s141] sm:$0x1]
    %v143 = vmul.f32 %v48, %v142
    %v144 = vadd.f32 %v140, %v143
    %s145 = scalar_lea.vmem %s6, 2
    %v146 = vld [vmem:[%s145] sm:$0x1]
    %v147 = vmul.f32 %v62, %v146
    %v148 = vadd.f32 %v144, %v147
    %v149 = vld [vmem:[%s1] sm:$0xff]
    %v150 = vld [vmem:[%s2] sm:$0xff]
    %v152 = vlaneseq
    %v153 = vshrl.u32 %v152, 7
    %v154 = vsub.s32 0, %v153
    %v155 = vrot.slane %v80, %v154
    %vm157 = vcmask 261120
    %v159 = vsel %vm157, %v149, 0
    %161 = vmatprep.subr.mxu0 0.0
    %162 = vmatpush1.msra.mxu0 %v67
    %163 = vmatprep.subr.mxu0 0.0
    %164 = vmatpush1.msra.mxu0 %v68
    %165 = vmatprep.subr.mxu0 0.0
    %166 = vmatpush1.msra.mxu0 %v69
    %167 = vmatprep.subr.mxu0 0.0
    %168 = vmatpush1.msra.mxu0 %v70
    %169 = vmatprep.subr.mxu0 0.0
    %170 = vmatpush1.msra.mxu0 0.0
    %171 = vmatprep.subr.mxu0 0.0
    %172 = vmatpush1.msra.mxu0 0.0
    %173 = vmatprep.subr.mxu0 0.0
    %174 = vmatpush1.msra.mxu0 0.0
    %175 = vmatprep.subr.mxu0 0.0
    %176 = vmatpush1.msra.mxu0 0.0
    %177 = vmatprep.subr.mxu0 0.0
    %178 = vmatpush1.msra.mxu0 0.0
    %179 = vmatprep.subr.mxu0 0.0
    %180 = vmatpush1.msra.mxu0 0.0
    %181 = vmatprep.subr.mxu0 0.0
    %182 = vmatpush1.msra.mxu0 0.0
    %183 = vmatprep.subr.mxu0 0.0
    %184 = vmatpush1.msra.mxu0 0.0
    %185 = vmatprep.subr.mxu0 0.0
    %186 = vmatpush1.msra.mxu0 0.0
    %187 = vmatprep.subr.mxu0 0.0
    %188 = vmatpush1.msra.mxu0 0.0
    %189 = vmatprep.subr.mxu0 0.0
    %190 = vmatpush1.msra.mxu0 0.0
    %191 = vmatprep.subr.mxu0 0.0
    %192 = vmatpush1.msra.mxu0 0.0
    %193 = vmatprep.subr.mxu0 0.0
    %194 = vmatpush1.msra.mxu0 0.0
    %195 = vmatprep.subr.mxu0 0.0
    %196 = vmatpush1.msra.mxu0 0.0
    %197 = vmatprep.subr.mxu0 0.0
    %198 = vmatpush1.msra.mxu0 0.0
    %199 = vmatprep.subr.mxu0 0.0
    %200 = vmatpush1.msra.mxu0 0.0
    %201 = vmatprep.subr.mxu0 0.0
    %202 = vmatpush1.msra.mxu0 0.0
    %203 = vmatprep.subr.mxu0 0.0
    %204 = vmatpush1.msra.mxu0 0.0
    %205 = vmatprep.subr.mxu0 0.0
    %206 = vmatpush1.msra.mxu0 0.0
    %207 = vmatprep.subr.mxu0 0.0
    %208 = vmatpush1.msra.mxu0 0.0
    %209 = vmatprep.subr.mxu0 0.0
    %210 = vmatpush1.msra.mxu0 0.0
    %211 = vmatprep.subr.mxu0 0.0
    %212 = vmatpush1.msra.mxu0 0.0
    %213 = vmatprep.subr.mxu0 0.0
    %214 = vmatpush1.msra.mxu0 0.0
    %215 = vmatprep.subr.mxu0 0.0
    %216 = vmatpush1.msra.mxu0 0.0
    %217 = vmatprep.subr.mxu0 0.0
    %218 = vmatpush1.msra.mxu0 0.0
    %219 = vmatprep.subr.mxu0 0.0
    %220 = vmatpush1.msra.mxu0 0.0
    %221 = vmatprep.subr.mxu0 0.0
    %222 = vmatpush1.msra.mxu0 0.0
    %223 = vmatprep.subr.mxu0 0.0
    %224 = vmatpush1.msra.mxu0 0.0
    %225 = vmatprep.mubr.f32.mxu0 0.0
    %226 = vmatmul.mubr.f32.gmra.mrb[0].mxu0 %v159
    %v227 = vpop.f32.mrb[0].mxu0
    %v228 = vadd.f32 %v155, %v227
    %v229 = vpop.f32.mrb[0].mxu0
    %230 = vdwg.mxu0
    %v231 = vtanh.pop %v228
    %233 = vrot.lane.b32.xlu0 %v150, 32
    %v234 = vpop.permute.xlu0 %233
    %v236 = vsel %vm157, %v231, %v234
    %v238 = vlaneseq
    %v239 = vshrl.u32 %v238, 7
    %v240 = vsub.s32 0, %v239
    %v241 = vrot.slane %v148, %v240
    %vm243 = vcmask 457728
    %v245 = vsel %vm243, %v236, 0
    %247 = vmatprep.subr.mxu0 0.0
    %248 = vmatpush1.msra.mxu0 %v132
    %249 = vmatprep.subr.mxu0 0.0
    %250 = vmatpush1.msra.mxu0 %v133
    %251 = vmatprep.subr.mxu0 0.0
    %252 = vmatpush1.msra.mxu0 %v134
    %253 = vmatprep.subr.mxu0 0.0
    %254 = vmatpush1.msra.mxu0 %v135
    %255 = vmatprep.subr.mxu0 0.0
    %256 = vmatpush1.msra.mxu0 %v136
    %257 = vmatprep.subr.mxu0 0.0
    %258 = vmatpush1.msra.mxu0 %v137
    %259 = vmatprep.subr.mxu0 0.0
    %260 = vmatpush1.msra.mxu0 %v138
    %261 = vmatprep.subr.mxu0 0.0
    %262 = vmatpush1.msra.mxu0 0.0
    %263 = vmatprep.subr.mxu0 0.0
    %264 = vmatpush1.msra.mxu0 0.0
    %265 = vmatprep.subr.mxu0 0.0
    %266 = vmatpush1.msra.mxu0 0.0
    %267 = vmatprep.subr.mxu0 0.0
    %268 = vmatpush1.msra.mxu0 0.0
    %269 = vmatprep.subr.mxu0 0.0
    %270 = vmatpush1.msra.mxu0 0.0
    %271 = vmatprep.subr.mxu0 0.0
    %272 = vmatpush1.msra.mxu0 0.0
    %273 = vmatprep.subr.mxu0 0.0
    %274 = vmatpush1.msra.mxu0 0.0
    %275 = vmatprep.subr.mxu0 0.0
    %276 = vmatpush1.msra.mxu0 0.0
    %277 = vmatprep.subr.mxu0 0.0
    %278 = vmatpush1.msra.mxu0 0.0
    %279 = vmatprep.subr.mxu0 0.0
    %280 = vmatpush1.msra.mxu0 0.0
    %281 = vmatprep.subr.mxu0 0.0
    %282 = vmatpush1.msra.mxu0 0.0
    %283 = vmatprep.subr.mxu0 0.0
    %284 = vmatpush1.msra.mxu0 0.0
    %285 = vmatprep.subr.mxu0 0.0
    %286 = vmatpush1.msra.mxu0 0.0
    %287 = vmatprep.subr.mxu0 0.0
    %288 = vmatpush1.msra.mxu0 0.0
    %289 = vmatprep.subr.mxu0 0.0
    %290 = vmatpush1.msra.mxu0 0.0
    %291 = vmatprep.subr.mxu0 0.0
    %292 = vmatpush1.msra.mxu0 0.0
    %293 = vmatprep.subr.mxu0 0.0
    %294 = vmatpush1.msra.mxu0 0.0
    %295 = vmatprep.subr.mxu0 0.0
    %296 = vmatpush1.msra.mxu0 0.0
    %297 = vmatprep.subr.mxu0 0.0
    %298 = vmatpush1.msra.mxu0 0.0
    %299 = vmatprep.subr.mxu0 0.0
    %300 = vmatpush1.msra.mxu0 0.0
    %301 = vmatprep.subr.mxu0 0.0
    %302 = vmatpush1.msra.mxu0 0.0
    %303 = vmatprep.subr.mxu0 0.0
    %304 = vmatpush1.msra.mxu0 0.0
    %305 = vmatprep.subr.mxu0 0.0
    %306 = vmatpush1.msra.mxu0 0.0
    %307 = vmatprep.subr.mxu0 0.0
    %308 = vmatpush1.msra.mxu0 0.0
    %309 = vmatprep.subr.mxu0 0.0
    %310 = vmatpush1.msra.mxu0 0.0
    %311 = vmatprep.mubr.f32.mxu0 0.0
    %312 = vmatmul.mubr.f32.gmra.mrb[0].mxu0 %v245
    %v313 = vpop.f32.mrb[0].mxu0
    %v314 = vadd.f32 %v241, %v313
    %v315 = vpop.f32.mrb[0].mxu0
    %316 = vdwg.mxu0
    %vm317 = vcmask 130048
    %318 = vst.msk [vmem:[#allocation4] sm:$0xff] %vm317, %v314
    // Predicated region
    $region26: #{tpu_custom_call.1} parent=1 // pred_check
      _
    $region27: #{tpu_custom_call.1} parent=1 // pred_check_branch
      %320 = sbr.rel (0) target = $region29
    $region28: #{tpu_custom_call.1} parent=1 // pred_region
      %s322 = ssub.s32 128, 128
      %323 = vsyncadd [#allocation5], %s322
      %s325 = sshll.u32 [#allocation4], 4
      %s326 = int_to_ptr.vmem [resolvable:$true] %s325
      %328 = dma.vmem_to_hbm [thread:$0]  %s326, 128, %s7, [#allocation5]
    $region29: #{tpu_custom_call.1} parent=1 // pred_fallthru
      _
    // Predicated region
    $region30: #{tpu_custom_call.1} parent=1 // pred_check
      _
    $region31: #{tpu_custom_call.1} parent=1 // pred_check_branch
      %330 = sbr.rel (0) target = $region33
    $region32: #{tpu_custom_call.1} parent=1 // pred_region
      %331 = dma.done [#allocation5], 128
    $region33: #{tpu_custom_call.1} parent=1 // pred_fallthru
      _
    %332 = vsyncpa [#allocation5], 1

</llo_original>
